<compile_context>
chip_gen: v7x
topology: tpu7x:2x2x1
jax: 0.10.0
libtpu: 0.0.40
codegen_flags: <defaults>
</compile_context>

<pallas_src>
import functools
import math

import jax
import jax.numpy as jnp
import numpy as np
from jax.experimental import pallas as pl
from jax.experimental.pallas import tpu as pltpu


def _round_up(a: int, m: int) -> int:
    return ((a + m - 1) // m) * m


def _pascal_row(k: int) -> list[float]:
    """Normalized 1D Pascal (binomial) row; outer(u, u) == pascal_kernel_2d(norm=True)."""
    row = [math.comb(k - 1, i) for i in range(k)]
    tot = float(sum(row))
    return [v / tot for v in row]


def _blurpool_kernel(x_ref, b_ref, o_ref, xpad_ref, *,
                     u, k, s, p, top, h, ho_pad, w, wo_pad, ncb, hs_al):
    # x_ref   : (ncb, h, w)        unpadded input block (only real data DMA'd)
    # b_ref   : (w, wo_pad) f32    column blur + stride-s downsample operator
    #                              (W zero-padding folded in)
    # o_ref   : (ncb, ho_pad, wo_pad)
    # xpad_ref: (ncb, hs_al, w)    persistent scratch; rows [top, top+h) hold
    #                              the block, rows outside are kept zero.
    dt = xpad_ref.dtype

    # (Re)zero the H-padding border rows every step: cheap, and keeps the
    # kernel correct when the "parallel" grid axis is sharded across cores
    # (each core's scratch gets zero borders on its own first step too).
    xpad_ref[:, 0:top, :] = jnp.zeros((ncb, top, w), dt)
    if hs_al > top + h:
        xpad_ref[:, top + h:hs_al, :] = jnp.zeros((ncb, hs_al - top - h, w), dt)

    # In-kernel padding: copy real data into the interior. top == 8 keeps the
    # destination sublane-aligned, so this VMEM copy needs no realignment.
    xpad_ref[:, top:top + h, :] = x_ref[...]

    # H blur + stride-s H downsample: k stride-s shifted row slices + VPU MACs.
    # Scratch row t holds padded-image row (t - (top - p)); output row m of
    # term ki reads padded row s*m + ki  ->  scratch row ki + top - p + s*m.
    acc = None
    for ki in range(k):
        start = ki + top - p
        if s == 1:
            sl = xpad_ref[:, start:start + ho_pad, :]
        else:
            sl = xpad_ref[:, pl.ds(start, ho_pad, s), :]
        term = u[ki] * sl.astype(jnp.float32)
        acc = term if acc is None else acc + term

    # W blur + stride-s W downsample: one fat MXU matmul, M = ncb * ho_pad.
    acc2 = acc.reshape(ncb * ho_pad, w)
    out = jnp.dot(acc2, b_ref[...], preferred_element_type=jnp.float32)
    o_ref[...] = out.reshape(ncb, ho_pad, wo_pad).astype(o_ref.dtype)


def blur_pool_2d(x: jnp.ndarray, kernel_size: int, stride: int = 2) -> jnp.ndarray:
    """Equivalent of BlurPool2D(kernel_size, stride)(x) for NCHW float input."""
    N, C, H, W = x.shape
    k, s = int(kernel_size), int(stride)
    assert k >= 1 and s >= 1
    p = (k - 1) // 2                     # _compute_zero_padding
    Hp, Wp = H + 2 * p, W + 2 * p
    Ho = (Hp - k) // s + 1
    Wo = (Wp - k) // s + 1
    assert Ho > 0 and Wo > 0
    # Valid outputs never read past the zero-padded image (guards odd k/s combos).
    assert s * (Ho - 1) + k <= Hp and s * (Wo - 1) + k <= Wp

    u = _pascal_row(k)

    # (8,128)-aligned output tile -> unmasked, lane-dense output stores.
    Ho_pad = _round_up(Ho, 8)
    Wo_pad = _round_up(Wo, 128)

    TOP = 8  # interior row offset inside the scratch (multiple of 8 => aligned copy)
    Hs_al = _round_up(max(TOP + H, s * (Ho_pad - 1) + k + TOP - p), 8)

    NC = N * C
    itemsize = jnp.dtype(x.dtype).itemsize
    W_lane = _round_up(W, 128)
    H_sub = _round_up(H, 8)

    # Honest per-plane VMEM footprint: x2 double-buffered in/out blocks, the
    # padded-input scratch, the f32 H-pass accumulator (+ one slice temp), and
    # the f32 matmul result before the store cast.
    in_tile = H_sub * W_lane * itemsize
    out_tile = Ho_pad * Wo_pad * itemsize
    scratch_tile = Hs_al * W_lane * itemsize
    acc_tile = Ho_pad * W_lane * 4
    mat_tile = Ho_pad * Wo_pad * 4
    per_plane = 2 * in_tile + 2 * out_tile + scratch_tile + 2 * acc_tile + mat_tile
    b_bytes = 2 * _round_up(W, 8) * Wo_pad * 4

    try:
        vmem_cap = int(pltpu.get_tpu_info().vmem_capacity_bytes)
    except Exception:  # pragma: no cover - conservative fallback
        vmem_cap = 64 * 1024 * 1024
    # ~45% of physical VMEM per step: ~57 MiB on v5e/v6e (128 MiB VMEM),
    # ~28 MiB on v7x (64 MiB / TensorCore), leaving headroom for Mosaic.
    budget = max(per_plane, int(vmem_cap * 0.45) - b_bytes)
    ncb_budget = max(1, budget // per_plane)
    # Keep >= ~8 grid steps so each v7x TensorCore pipelines >= ~4 steps.
    ncb_cap = max(1, NC // 8)
    ncb_max = max(1, min(ncb_budget, ncb_cap, NC))
    NCb = 1
    for d in range(ncb_max, 0, -1):   # largest divisor of NC within budget/cap
        if NC % d == 0:
            NCb = d
            break
    grid = (NC // NCb,)

    footprint = NCb * per_plane + b_bytes
    vmem_limit = int(min(vmem_cap, max(footprint + (8 << 20), 32 * 1024 * 1024)))

    x2 = x.reshape(NC, H, W)  # free row-major reshape, no HBM copy

    # Column operator B: (W, Wo_pad); B[s*j + kj - p, j] = u[kj] whenever the
    # source column is in range (out-of-range taps are the W zero-padding).
    Bnp = np.zeros((W, Wo_pad), dtype=np.float32)
    for j in range(Wo):
        for kj in range(k):
            wsrc = s * j + kj - p
            if 0 <= wsrc < W:
                Bnp[wsrc, j] = u[kj]
    B = jnp.asarray(Bnp)

    kernel = functools.partial(
        _blurpool_kernel, u=u, k=k, s=s, p=p, top=TOP, h=H,
        ho_pad=Ho_pad, w=W, wo_pad=Wo_pad, ncb=NCb, hs_al=Hs_al)

    flops = 2 * NC * Ho_pad * W * (k + Wo_pad)
    bytes_accessed = (x2.size * itemsize + B.size * 4
                      + NC * Ho_pad * Wo_pad * itemsize)

    out_full = pl.pallas_call(
        kernel,
        out_shape=jax.ShapeDtypeStruct((NC, Ho_pad, Wo_pad), x.dtype),
        grid=grid,
        in_specs=[
            pl.BlockSpec((NCb, H, W), lambda i: (i, 0, 0)),
            pl.BlockSpec((W, Wo_pad), lambda i: (0, 0)),
        ],
        out_specs=pl.BlockSpec((NCb, Ho_pad, Wo_pad), lambda i: (i, 0, 0)),
        scratch_shapes=[pltpu.VMEM((NCb, Hs_al, W), x.dtype)],
        compiler_params=pltpu.CompilerParams(
            dimension_semantics=("parallel",),
            vmem_limit_bytes=vmem_limit),
        cost_estimate=pl.CostEstimate(
            flops=flops, transcendentals=0, bytes_accessed=bytes_accessed),
    )(x2, B)

    return out_full[:, :Ho, :Wo].reshape(N, C, Ho, Wo)


def _reference_blur_pool_2d(x, kernel_size, stride):
    """Pure-JAX reference mirroring the PyTorch forward (depthwise conv2d)."""
    N, C, H, W = x.shape
    k, s = kernel_size, stride
    p = (k - 1) // 2
    row = jnp.asarray([math.comb(k - 1, i) for i in range(k)], dtype=jnp.float32)
    k2d = jnp.outer(row, row)
    k2d = k2d / jnp.sum(k2d)                                   # norm=True
    w = jnp.broadcast_to(k2d, (C, 1, k, k)).astype(x.dtype)    # kernel.repeat((C,1,1,1))
    return jax.lax.conv_general_dilated(
        x, w,
        window_strides=(s, s),
        padding=[(p, p), (p, p)],
        feature_group_count=C,
        dimension_numbers=("NCHW", "OIHW", "NCHW"),
    )


if __name__ == "__main__":
    key = jax.random.PRNGKey(0)
    N, C, H, W = 2, 4, 16, 16
    kernel_size, stride = 3, 2

    x = jax.random.normal(key, (N, C, H, W), dtype=jnp.float32)

    out = blur_pool_2d(x, kernel_size=kernel_size, stride=stride)
    out = jax.block_until_ready(out)

    ref = _reference_blur_pool_2d(x, kernel_size, stride)
    assert out.shape == ref.shape, (out.shape, ref.shape)
    assert jnp.allclose(out, ref, atol=1e-5, rtol=1e-5), "mismatch vs conv reference"

    print("KERNEL_OK")
</pallas_src>

<mosaic_0001>
module attributes {stable_mosaic.version = 11 : i64} {
  func.func @_blurpool_kernel(%arg0: i32, %arg1: memref<1x16x16xf32, #tpu.memory_space<vmem>>, %arg2: memref<16x128xf32, #tpu.memory_space<vmem>>, %arg3: memref<1x8x128xf32, #tpu.memory_space<vmem>>, %arg4: memref<1x24x16xf32, #tpu.memory_space<vmem>>) attributes {dimension_semantics = [#tpu.dimension_semantics<parallel>], iteration_bounds = array<i64: 8>, scalar_prefetch = 0 : i64, scratch_operands = 1 : i64, tpu.core_type = #tpu.core_type<tc>, window_params = [{transform_indices = @transform_0, window_bounds = array<i64: 1, 16, 16>}, {pipeline_mode = #tpu.pipeline_mode<synchronous>, transform_indices = @transform_1, window_bounds = array<i64: 16, 128>}, {transform_indices = @transform_2, window_bounds = array<i64: 1, 8, 128>}]} {
    %cst = arith.constant 0.000000e+00 : f32
    %0 = vector.broadcast %cst : f32 to vector<1x8x16xf32>
    %c0 = arith.constant 0 : index
    %c0_0 = arith.constant 0 : index
    %c0_1 = arith.constant 0 : index
    %1 = vector.load %arg4[%c0, %c0_0, %c0_1] : memref<1x24x16xf32, #tpu.memory_space<vmem>>, vector<1x8x16xf32>
    tpu.vector_store %arg4[%c0, %c0_0, %c0_1], %0 {strides = array<i32>} : memref<1x24x16xf32, #tpu.memory_space<vmem>>, vector<1x8x16xf32>,
    %c0_2 = arith.constant 0 : index
    %c0_3 = arith.constant 0 : index
    %c0_4 = arith.constant 0 : index
    %2 = vector.load %arg1[%c0_2, %c0_3, %c0_4] : memref<1x16x16xf32, #tpu.memory_space<vmem>>, vector<1x16x16xf32>
    %c0_5 = arith.constant 0 : index
    %c8 = arith.constant 8 : index
    %c0_6 = arith.constant 0 : index
    %3 = vector.load %arg4[%c0_5, %c8, %c0_6] : memref<1x24x16xf32, #tpu.memory_space<vmem>>, vector<1x16x16xf32>
    tpu.vector_store %arg4[%c0_5, %c8, %c0_6], %2 {strides = array<i32>} : memref<1x24x16xf32, #tpu.memory_space<vmem>>, vector<1x16x16xf32>,
    %c0_7 = arith.constant 0 : index
    %c7 = arith.constant 7 : index
    %c0_8 = arith.constant 0 : index
    %4 = tpu.strided_load %arg4[%c0_7, %c7, %c0_8] {strides = array<i32: 1, 2, 1>} : memref<1x24x16xf32, #tpu.memory_space<vmem>>, vector<1x8x16xf32>
    %cst_9 = arith.constant 2.500000e-01 : f32
    %5 = vector.broadcast %cst_9 : f32 to vector<1x8x16xf32>
    %6 = arith.mulf %5, %4 : vector<1x8x16xf32>
    %c0_10 = arith.constant 0 : index
    %c8_11 = arith.constant 8 : index
    %c0_12 = arith.constant 0 : index
    %7 = tpu.strided_load %arg4[%c0_10, %c8_11, %c0_12] {strides = array<i32: 1, 2, 1>} : memref<1x24x16xf32, #tpu.memory_space<vmem>>, vector<1x8x16xf32>
    %cst_13 = arith.constant 5.000000e-01 : f32
    %8 = vector.broadcast %cst_13 : f32 to vector<1x8x16xf32>
    %9 = arith.mulf %8, %7 : vector<1x8x16xf32>
    %10 = arith.addf %6, %9 : vector<1x8x16xf32>
    %c0_14 = arith.constant 0 : index
    %c9 = arith.constant 9 : index
    %c0_15 = arith.constant 0 : index
    %11 = tpu.strided_load %arg4[%c0_14, %c9, %c0_15] {strides = array<i32: 1, 2, 1>} : memref<1x24x16xf32, #tpu.memory_space<vmem>>, vector<1x8x16xf32>
    %cst_16 = arith.constant 2.500000e-01 : f32
    %12 = vector.broadcast %cst_16 : f32 to vector<1x8x16xf32>
    %13 = arith.mulf %12, %11 : vector<1x8x16xf32>
    %14 = arith.addf %10, %13 : vector<1x8x16xf32>
    %15 = vector.shape_cast %14 : vector<1x8x16xf32> to vector<8x16xf32>
    %c0_17 = arith.constant 0 : index
    %c0_18 = arith.constant 0 : index
    %16 = vector.load %arg2[%c0_17, %c0_18] : memref<16x128xf32, #tpu.memory_space<vmem>>, vector<16x128xf32>
    %cst_19 = arith.constant dense<0.000000e+00> : vector<8x128xf32>
    %17 = tpu.matmul %15, %16, %cst_19 {dimension_numbers = #tpu.dot_dimension_numbers<[1], [0], [0], [1], [0, 0, 1, 1], [], []>} : vector<8x16xf32>, vector<16x128xf32>, vector<8x128xf32> -> vector<8x128xf32>
    %18 = vector.shape_cast %17 : vector<8x128xf32> to vector<1x8x128xf32>
    %c0_20 = arith.constant 0 : index
    %c0_21 = arith.constant 0 : index
    %c0_22 = arith.constant 0 : index
    %19 = vector.load %arg3[%c0_20, %c0_21, %c0_22] : memref<1x8x128xf32, #tpu.memory_space<vmem>>, vector<1x8x128xf32>
    tpu.vector_store %arg3[%c0_20, %c0_21, %c0_22], %18 {strides = array<i32>} : memref<1x8x128xf32, #tpu.memory_space<vmem>>, vector<1x8x128xf32>,
    return
  }
  func.func @transform_0(%arg0: i32) -> (i32, i32, i32) {
    %c0_i32 = arith.constant 0 : i32
    %c0_i32_0 = arith.constant 0 : i32
    %c0_i32_1 = arith.constant 0 : i32
    return %arg0, %c0_i32, %c0_i32_0 : i32, i32, i32
  }
  func.func @transform_1(%arg0: i32) -> (i32, i32) {
    %c0_i32 = arith.constant 0 : i32
    %c0_i32_0 = arith.constant 0 : i32
    %c0_i32_1 = arith.constant 0 : i32
    return %c0_i32, %c0_i32_0 : i32, i32
  }
  func.func @transform_2(%arg0: i32) -> (i32, i32, i32) {
    %c0_i32 = arith.constant 0 : i32
    %c0_i32_0 = arith.constant 0 : i32
    %c0_i32_1 = arith.constant 0 : i32
    return %arg0, %c0_i32, %c0_i32_0 : i32, i32, i32
  }
}

</mosaic_0001>

<llo_original>
// kernel: tpu_custom_call.1
$region0: #{tpu_custom_call.1}
  #allocation0 [shape = 'u32[]', space=smem, size = 0x4, offset = 0x4, fixed_abs, tag = 'smem constant byte address 0x4 - core index']
  #allocation1 [shape = 'u32[144,128]{1,0:T(1,128)}', space=vmem, size = 0x12000, scoped, tag = 'internal scratch']
  #allocation2 [shape = 'f32[1,24,16]{2,1,0:T(8,128)}', space=vmem, size = 0x3000, scoped, tag = 'scratch operand']
  %s0 = inlined_call_operand.hbm [shape: f32[8,16,16], index: 0, kind: input, shape index: {}]
  %s1 = inlined_call_operand.hbm [shape: f32[16,128], index: 1, kind: input, shape index: {}]
  %s2 = inlined_call_operand.hbm [shape: f32[8,8,128], index: 2, kind: output, shape index: {}]
  %s3 = sld [smem:[#allocation0]]
  $region49: #{tpu_custom_call.1} parent=0
    _
  %s5 = ssub.s32 1, %s3
  %s6 = scalar_select 0, %s5, %s3
  $region1: #{tpu_custom_call.1} parent=0
    #allocation3 [shape = 'u8[16384]{0}', space=vmem, size = 0x4000, scoped, tag = 'input window, operand 0']
    #allocation4 [shape = 's32[2]{0}', space=sflag, size = 0x8, scoped, tag = 'scoped memory for tpu_custom_call.1']
    #allocation5 [shape = 's32[2]{0}', space=sflag, size = 0x8, scoped, tag = 'scoped memory for tpu_custom_call.1']
    #allocation6 [shape = 'u8[8192]{0}', space=vmem, size = 0x2000, scoped, tag = 'input window, operand 1, single buffered']
    #allocation7 [shape = 's32[1]{0}', space=sflag, size = 0x4, scoped, tag = 'scoped memory for tpu_custom_call.1']
    #allocation8 [shape = 'u8[8192]{0}', space=vmem, size = 0x2000, scoped, tag = 'output window, operand 0']
    %7 = vsyncpa [#allocation4], 0
    %s8 = scalar_lea.sflag [#allocation4], 1
    %9 = vsyncpa %s8, 0
    %10 = vsyncpa [#allocation7], 0
    %11 = vsyncpa [#allocation5], 0
    %s12 = scalar_lea.sflag [#allocation5], 1
    %13 = vsyncpa %s12, 0
    loop: start=0, step=1, limit=10
    $region2: #{tpu_custom_call.1} parent=1 // loop_pre_header
      _
    $region3: #{tpu_custom_call.1} parent=1 // loop_header
      %s15 = sphi 0, %s19
      %p16 = scmp.ge.s32.totalorder %s15, 10
      %s25 = sphi 0, %s27
      %s28 = sphi 0, %s25
      %s29 = sphi 0, %s28
      %s45 = sphi 0, %s29
      %s49 = sphi 0, %s49
      %s51 = sphi 0, %s49
      %s52 = sphi 0, %s51
      %s66 = sphi 0, %s52
      %s72 = sphi 0, %s74
      %s75 = sphi 0, %s72
      %s76 = sphi 0, %s75
      %s92 = sphi 0, %s76
    $region4: #{tpu_custom_call.1} parent=1 // loop_header_branch
      %18 = sbr.rel (%p16) target = $region8
    $region5: #{tpu_custom_call.1} parent=1 // loop_body
      %s20 = ssub.s32 %s15, 1
      %s21 = ssub.s32 %s15, 2
      %s22 = sadd.s32 %s15, 1
      %s23 = ssub.s32 %s15, %s22
      %p24 = scmp.eq.s32.totalorder %s23, 0
      %s26 = sadd.s32 %s25, 1
      %s27 = scalar_select %p24, %s25, %s26
      %p30 = pneg %p24
      %p31 = scmp.eq.s32.totalorder %s15, 7
      %p32 = por %p30, %p31
      %p33 = scmp.ne.s32.totalorder %s25, %s28
      %p34 = scmp.eq.s32.totalorder %s15, 0
      %p35 = por %p33, %p34
      %p36 = scmp.ne.s32.totalorder %s25, %s28
      %p37 = scmp.eq.s32.totalorder %s20, 7
      %p38 = por %p36, %p37
      %p39 = scmp.ne.s32.totalorder %s28, %s29
      %p40 = scmp.eq.s32.totalorder %s20, 0
      %p41 = por %p39, %p40
      %p42 = scmp.ne.s32.totalorder %s28, %s29
      %p43 = scmp.eq.s32.totalorder %s21, 7
      %p44 = por %p42, %p43
      %p46 = scmp.ne.s32.totalorder %s29, %s45
      %p47 = scmp.eq.s32.totalorder %s21, 0
      %p48 = por %p46, %p47
      %s50 = sadd.s32 %s49, 1
      %p53 = scmp.eq.s32.totalorder %s15, 7
      %p54 = scmp.ne.s32.totalorder %s49, %s51
      %p55 = scmp.eq.s32.totalorder %s15, 0
      %p56 = por %p54, %p55
      %p57 = scmp.ne.s32.totalorder %s49, %s51
      %p58 = scmp.eq.s32.totalorder %s20, 7
      %p59 = por %p57, %p58
      %p60 = scmp.ne.s32.totalorder %s51, %s52
      %p61 = scmp.eq.s32.totalorder %s20, 0
      %p62 = por %p60, %p61
      %p63 = scmp.ne.s32.totalorder %s51, %s52
      %p64 = scmp.eq.s32.totalorder %s21, 7
      %p65 = por %p63, %p64
      %p67 = scmp.ne.s32.totalorder %s52, %s66
      %p68 = scmp.eq.s32.totalorder %s21, 0
      %p69 = por %p67, %p68
      %s70 = ssub.s32 %s15, %s22
      %p71 = scmp.eq.s32.totalorder %s70, 0
      %s73 = sadd.s32 %s72, 1
      %s74 = scalar_select %p71, %s72, %s73
      %p77 = pneg %p71
      %p78 = scmp.eq.s32.totalorder %s15, 7
      %p79 = por %p77, %p78
      %p80 = scmp.ne.s32.totalorder %s72, %s75
      %p81 = scmp.eq.s32.totalorder %s15, 0
      %p82 = por %p80, %p81
      %p83 = scmp.ne.s32.totalorder %s72, %s75
      %p84 = scmp.eq.s32.totalorder %s20, 7
      %p85 = por %p83, %p84
      %p86 = scmp.ne.s32.totalorder %s75, %s76
      %p87 = scmp.eq.s32.totalorder %s20, 0
      %p88 = por %p86, %p87
      %p89 = scmp.ne.s32.totalorder %s75, %s76
      %p90 = scmp.eq.s32.totalorder %s21, 7
      %p91 = por %p89, %p90
      %p93 = scmp.ne.s32.totalorder %s76, %s92
      %p94 = scmp.eq.s32.totalorder %s21, 0
      %p95 = por %p93, %p94
      %p96 = scmp.le.s32.totalorder 1, %s15
      %p97 = scmp.lt.s32.totalorder %s15, 9
      %p98 = pnand %p96, %p97
      %p99 = pneg %p98
      // Predicated region
      $region9: #{tpu_custom_call.1} parent=5 // pred_check
        _
      $region10: #{tpu_custom_call.1} parent=5 // pred_check_branch
        %101 = sbr.rel (%p98) target = $region12
      $region11: #{tpu_custom_call.1} parent=5 // pred_region
        %s102 = ssub.s32 %s15, 1
        // Predicated region
        $region13: #{tpu_custom_call.1} parent=11 // pred_check
          %p103 = pneg %p62
        $region14: #{tpu_custom_call.1} parent=11 // pred_check_branch
          %105 = sbr.rel (%p103) target = $region16
        $region15: #{tpu_custom_call.1} parent=11 // pred_region
          %s107 = ssub.s32 256, 256
          %108 = vsyncadd [#allocation7], %s107
          %s109 = sshll.u32 [#allocation6], 4
          %s110 = int_to_ptr.vmem [resolvable:$true] %s109
          %115 = dma.hbm_to_vmem [thread:$0]  %s1, 256, %s110, [#allocation7], 128, 128, 8
        $region16: #{tpu_custom_call.1} parent=11 // pred_fallthru
          _
      $region12: #{tpu_custom_call.1} parent=5 // pred_fallthru
        _
      %p116 = scmp.lt.s32.totalorder %s15, 8
      // Predicated region
      $region17: #{tpu_custom_call.1} parent=5 // pred_check
        %p117 = pneg %p116
      $region18: #{tpu_custom_call.1} parent=5 // pred_check_branch
        %119 = sbr.rel (%p117) target = $region20
      $region19: #{tpu_custom_call.1} parent=5 // pred_region
        // Predicated region
        $region21: #{tpu_custom_call.1} parent=19 // pred_check
          %p120 = pneg %p35
        $region22: #{tpu_custom_call.1} parent=19 // pred_check_branch
          %122 = sbr.rel (%p120) target = $region24
        $region23: #{tpu_custom_call.1} parent=19 // pred_region
          %s123 = sand.u32 %s25, 1
          %s124 = scalar_lea.sflag [#allocation4], %s123
          %s125 = sand.u32 %s25, 1
          %s126 = smul.addr %s125, 16
          %s127 = scalar_lea.vmem [#allocation3], %s126
          %s129 = ssub.s32 256, 256
          %130 = vsyncadd %s124, %s129
          %s131 = smul.addr %s15, 2
          %s132 = smul.addr %s131, 128
          %s133 = scalar_lea.hbm %s0, %s132
          %s134 = sshll.u32 %s127, 4
          %s135 = int_to_ptr.vmem [resolvable:$true] %s134
          %140 = dma.hbm_to_vmem [thread:$0]  %s133, 256, %s135, %s124, 128, 128, 8
        $region24: #{tpu_custom_call.1} parent=19 // pred_fallthru
          _
      $region20: #{tpu_custom_call.1} parent=5 // pred_fallthru
        _
      %p141 = scmp.le.s32.totalorder 1, %s15
      %p142 = scmp.lt.s32.totalorder %s15, 9
      %p143 = pnand %p141, %p142
      %p144 = pneg %p143
      // Predicated region
      $region25: #{tpu_custom_call.1} parent=5 // pred_check
        _
      $region26: #{tpu_custom_call.1} parent=5 // pred_check_branch
        %146 = sbr.rel (%p143) target = $region28
      $region27: #{tpu_custom_call.1} parent=5 // pred_region
        %s147 = ssub.s32 %s15, 1
        %s148 = sand.u32 %s28, 1
        %s149 = scalar_lea.sflag [#allocation4], %s148
        %s150 = sand.u32 %s28, 1
        %s151 = smul.addr %s150, 16
        %s152 = scalar_lea.vmem [#allocation3], %s151
        // Predicated region
        $region29: #{tpu_custom_call.1} parent=27 // pred_check
          %p153 = pneg %p41
        $region30: #{tpu_custom_call.1} parent=27 // pred_check_branch
          %155 = sbr.rel (%p153) target = $region32
        $region31: #{tpu_custom_call.1} parent=27 // pred_region
          %156 = dma.done %s149, 256
        $region32: #{tpu_custom_call.1} parent=27 // pred_fallthru
          _
        // Predicated region
        $region33: #{tpu_custom_call.1} parent=27 // pred_check
          %p157 = pneg %p62
        $region34: #{tpu_custom_call.1} parent=27 // pred_check_branch
          %159 = sbr.rel (%p157) target = $region36
        $region35: #{tpu_custom_call.1} parent=27 // pred_region
          %160 = dma.done [#allocation7], 256
        $region36: #{tpu_custom_call.1} parent=27 // pred_fallthru
          _
        %s161 = sand.u32 %s28, 1
        %s162 = scalar_lea.sflag [#allocation4], %s161
        %s163 = sand.u32 %s28, 1
        %s164 = smul.addr %s163, 16
        %s165 = scalar_lea.vmem [#allocation3], %s164
        %p166 = pneg %p41
        %p167 = pneg %p38
        %p168 = pneg %p62
        %p169 = pneg %p59
        %p170 = pneg %p88
        %p171 = pneg %p85
        %s172 = sand.u32 %s75, 1
        %s173 = scalar_lea.sflag [#allocation5], %s172
        %s174 = sand.u32 %s75, 1
        %s175 = smul.addr %s174, 8
        %s176 = scalar_lea.vmem [#allocation8], %s175
        %vm177 = vcmask 130048
        %178 = vst.msk [vmem:[#allocation2] sm:$0xff] %vm177, 0.0
        %v179 = vld [vmem:[%s152] sm:$0xff]
        %v180 = vld [vmem:[%s152 + $0x8] sm:$0xff]
        %181 = vst.msk [vmem:[#allocation2 + $0x8] sm:$0xff] %vm177, %v179
        %182 = vst.msk [vmem:[#allocation2 + $0x10] sm:$0xff] %vm177, %v180
        %s183 = scalar_lea.vmem [#allocation2], 7
        %v184 = vld [vmem:[%s183] ss:$2 sm:$0xff]
        %v185 = vmul.f32 %v184, 0.25
        %s186 = scalar_lea.vmem [#allocation2], 8
        %v187 = vld [vmem:[%s186] ss:$2 sm:$0xff]
        %v188 = vmul.f32 %v187, 0.5
        %v189 = vadd.f32 %v185, %v188
        %s190 = scalar_lea.vmem [#allocation2], 9
        %v191 = vld [vmem:[%s190] ss:$2 sm:$0xff]
        %v192 = vmul.f32 %v191, 0.25
        %v193 = vadd.f32 %v189, %v192
        %v194 = vld [vmem:[#allocation6] sm:$0xff]
        %v195 = vld [vmem:[#allocation6 + $0x8] sm:$0xff]
        %v197 = vsel %vm177, %v193, 0
        %199 = vmatprep.subr.mxu0 0.0
        %200 = vmatpush1.msra.mxu0 %v194
        %201 = vmatprep.subr.mxu0 0.0
        %202 = vmatpush1.msra.mxu0 %v195
        %203 = vmatprep.subr.mxu0 0.0
        %204 = vmatpush1.msra.mxu0 0.0
        %205 = vmatprep.subr.mxu0 0.0
        %206 = vmatpush1.msra.mxu0 0.0
        %207 = vmatprep.subr.mxu0 0.0
        %208 = vmatpush1.msra.mxu0 0.0
        %209 = vmatprep.subr.mxu0 0.0
        %210 = vmatpush1.msra.mxu0 0.0
        %211 = vmatprep.subr.mxu0 0.0
        %212 = vmatpush1.msra.mxu0 0.0
        %213 = vmatprep.subr.mxu0 0.0
        %214 = vmatpush1.msra.mxu0 0.0
        %215 = vmatprep.subr.mxu0 0.0
        %216 = vmatpush1.msra.mxu0 0.0
        %217 = vmatprep.subr.mxu0 0.0
        %218 = vmatpush1.msra.mxu0 0.0
        %219 = vmatprep.subr.mxu0 0.0
        %220 = vmatpush1.msra.mxu0 0.0
        %221 = vmatprep.subr.mxu0 0.0
        %222 = vmatpush1.msra.mxu0 0.0
        %223 = vmatprep.subr.mxu0 0.0
        %224 = vmatpush1.msra.mxu0 0.0
        %225 = vmatprep.subr.mxu0 0.0
        %226 = vmatpush1.msra.mxu0 0.0
        %227 = vmatprep.subr.mxu0 0.0
        %228 = vmatpush1.msra.mxu0 0.0
        %229 = vmatprep.subr.mxu0 0.0
        %230 = vmatpush1.msra.mxu0 0.0
        %231 = vmatprep.subr.mxu0 0.0
        %232 = vmatpush1.msra.mxu0 0.0
        %233 = vmatprep.subr.mxu0 0.0
        %234 = vmatpush1.msra.mxu0 0.0
        %235 = vmatprep.subr.mxu0 0.0
        %236 = vmatpush1.msra.mxu0 0.0
        %237 = vmatprep.subr.mxu0 0.0
        %238 = vmatpush1.msra.mxu0 0.0
        %239 = vmatprep.subr.mxu0 0.0
        %240 = vmatpush1.msra.mxu0 0.0
        %241 = vmatprep.subr.mxu0 0.0
        %242 = vmatpush1.msra.mxu0 0.0
        %243 = vmatprep.subr.mxu0 0.0
        %244 = vmatpush1.msra.mxu0 0.0
        %245 = vmatprep.subr.mxu0 0.0
        %246 = vmatpush1.msra.mxu0 0.0
        %247 = vmatprep.subr.mxu0 0.0
        %248 = vmatpush1.msra.mxu0 0.0
        %249 = vmatprep.subr.mxu0 0.0
        %250 = vmatpush1.msra.mxu0 0.0
        %251 = vmatprep.subr.mxu0 0.0
        %252 = vmatpush1.msra.mxu0 0.0
        %253 = vmatprep.subr.mxu0 0.0
        %254 = vmatpush1.msra.mxu0 0.0
        %255 = vmatprep.subr.mxu0 0.0
        %256 = vmatpush1.msra.mxu0 0.0
        %257 = vmatprep.subr.mxu0 0.0
        %258 = vmatpush1.msra.mxu0 0.0
        %259 = vmatprep.subr.mxu0 0.0
        %260 = vmatpush1.msra.mxu0 0.0
        %261 = vmatprep.subr.mxu0 0.0
        %262 = vmatpush1.msra.mxu0 0.0
        %263 = vmatprep.mubr.f32.mxu0 0.0
        %264 = vmatmul.mubr.f32.gmra.mrb[0].mxu0 %v197
        %v265 = vpop.f32.mrb[0].mxu0
        %v266 = vadd.f32 0.0, %v265
        %v267 = vpop.f32.mrb[0].mxu0
        %268 = vdwg.mxu0
        %269 = vst [vmem:[%s176] sm:$0xff] %v266
        %s270 = sand.u32 %s75, 1
        %s271 = scalar_lea.sflag [#allocation5], %s270
        %s272 = sand.u32 %s75, 1
        %s273 = smul.addr %s272, 8
        %s274 = scalar_lea.vmem [#allocation8], %s273
        // Predicated region
        $region37: #{tpu_custom_call.1} parent=27 // pred_check
          %p275 = pneg %p85
        $region38: #{tpu_custom_call.1} parent=27 // pred_check_branch
          %277 = sbr.rel (%p275) target = $region40
        $region39: #{tpu_custom_call.1} parent=27 // pred_region
          %s279 = ssub.s32 128, 128
          %280 = vsyncadd %s271, %s279
          %s281 = smul.addr %s20, 128
          %s282 = scalar_lea.hbm %s2, %s281
          %s284 = sshll.u32 %s274, 4
          %s285 = int_to_ptr.vmem [resolvable:$true] %s284
          %287 = dma.vmem_to_hbm [thread:$0]  %s285, 128, %s282, %s271
        $region40: #{tpu_custom_call.1} parent=27 // pred_fallthru
          _
      $region28: #{tpu_custom_call.1} parent=5 // pred_fallthru
        _
      %p288 = scmp.le.s32.totalorder 2, %s15
      // Predicated region
      $region41: #{tpu_custom_call.1} parent=5 // pred_check
        %p289 = pneg %p288
      $region42: #{tpu_custom_call.1} parent=5 // pred_check_branch
        %291 = sbr.rel (%p289) target = $region44
      $region43: #{tpu_custom_call.1} parent=5 // pred_region
        %s292 = ssub.s32 %s15, 2
        // Predicated region
        $region45: #{tpu_custom_call.1} parent=43 // pred_check
          %p293 = pneg %p91
        $region46: #{tpu_custom_call.1} parent=43 // pred_check_branch
          %295 = sbr.rel (%p293) target = $region48
        $region47: #{tpu_custom_call.1} parent=43 // pred_region
          %s296 = sand.u32 %s76, 1
          %s297 = scalar_lea.sflag [#allocation5], %s296
          %s298 = sand.u32 %s76, 1
          %s299 = smul.addr %s298, 8
          %s300 = scalar_lea.vmem [#allocation8], %s299
          %301 = dma.done %s297, 128
        $region48: #{tpu_custom_call.1} parent=43 // pred_fallthru
          _
      $region44: #{tpu_custom_call.1} parent=5 // pred_fallthru
        _
    $region6: #{tpu_custom_call.1} parent=1 // loop_footer
      %s19 = sadd.s32 1, %s15
    $region7: #{tpu_custom_call.1} parent=1 // loop_footer_branch
      %14 = sbr.rel target = $region3
    $region8: #{tpu_custom_call.1} parent=1 // loop_exit
      _
    %302 = vsyncpa [#allocation4], 1
    %s303 = scalar_lea.sflag [#allocation4], 1
    %304 = vsyncpa %s303, 1
    %305 = vsyncpa [#allocation7], 1
    %306 = vsyncpa [#allocation5], 1
    %s307 = scalar_lea.sflag [#allocation5], 1
    %308 = vsyncpa %s307, 1

</llo_original>
